<compile_context>
chip_gen: v6e
topology: v6e:2x2x1
jax: 0.10.0
libtpu: 0.0.40
codegen_flags: <defaults>
</compile_context>

<pallas_src>
import jax
import jax.numpy as jnp
from jax.experimental import pallas as pl
from jax.experimental.pallas import tpu as pltpu

D_IN = 100        # latent dim (module spec)
D_H = 256         # hidden dim
D_OUT = 784       # output dim (28*28)

D_IN_PAD = 128    # lane-aligned latent dim
D_OUT_PAD = 896   # 7 * 128, lane-aligned output dim


def _round_up(x, m):
    return (x + m - 1) // m * m


def generator_kernel(x_ref, w1_ref, b1_ref, w2_ref, b2_ref, w3_ref, b3_ref, o_ref):
    """Fused 3-layer MLP forward for one batch tile. All operands resident in VMEM.

    x / weights are bf16 (MXU rate), accumulation + bias + activations in f32.
    """
    x = x_ref[...]  # (tile, 128) bf16

    # Layer 1: Linear(128 -> 256) + ReLU   (rows 100..127 of W1 are zero padding)
    h = jnp.dot(x, w1_ref[...], preferred_element_type=jnp.float32) + b1_ref[...]
    h = jnp.maximum(h, 0.0)

    # Layer 2: Linear(256 -> 256) + ReLU
    h = jnp.dot(h.astype(jnp.bfloat16), w2_ref[...],
                preferred_element_type=jnp.float32) + b2_ref[...]
    h = jnp.maximum(h, 0.0)

    # Layer 3: Linear(256 -> 896) + Tanh   (cols 784..895 are zero padding)
    h = jnp.dot(h.astype(jnp.bfloat16), w3_ref[...],
                preferred_element_type=jnp.float32) + b3_ref[...]
    o_ref[...] = jnp.tanh(h).astype(o_ref.dtype)


def generator_forward(x, params, *, batch_tile=256):
    """x: (B, 100) float32 -> (B, 784) float32."""
    w1, b1, w2, b2, w3, b3 = params
    B = x.shape[0]

    # Batch tile: multiple of 16 (bf16 sublane packing), capped by (padded) batch.
    tile = _round_up(min(batch_tile, _round_up(B, 16)), 16)
    B_pad = _round_up(B, tile)

    # --- host-side (traced, outside the kernel) padding + bf16 casts -------------
    # Latent dim 100 -> 128 (zeros), batch -> multiple of tile (zeros).
    x_p = jnp.pad(x, ((0, B_pad - B), (0, D_IN_PAD - D_IN))).astype(jnp.bfloat16)
    # W1 rows 100 -> 128 (zeros); W3 / b3 cols 784 -> 896 (zeros).
    w1_p = jnp.pad(w1, ((0, D_IN_PAD - D_IN), (0, 0))).astype(jnp.bfloat16)
    w2_p = w2.astype(jnp.bfloat16)
    w3_p = jnp.pad(w3, ((0, 0), (0, D_OUT_PAD - D_OUT))).astype(jnp.bfloat16)
    b1_p = b1.astype(jnp.float32)
    b2_p = b2.astype(jnp.float32)
    b3_p = jnp.pad(b3, ((0, 0), (0, D_OUT_PAD - D_OUT))).astype(jnp.float32)

    grid = (B_pad // tile,)

    in_specs = [
        pl.BlockSpec((tile, D_IN_PAD), lambda i: (i, 0)),      # x tile
        pl.BlockSpec((D_IN_PAD, D_H), lambda i: (0, 0)),       # W1 (resident)
        pl.BlockSpec((1, D_H), lambda i: (0, 0)),              # b1
        pl.BlockSpec((D_H, D_H), lambda i: (0, 0)),            # W2 (resident)
        pl.BlockSpec((1, D_H), lambda i: (0, 0)),              # b2
        pl.BlockSpec((D_H, D_OUT_PAD), lambda i: (0, 0)),      # W3 (resident)
        pl.BlockSpec((1, D_OUT_PAD), lambda i: (0, 0)),        # b3
    ]
    out_spec = pl.BlockSpec((tile, D_OUT_PAD), lambda i: (i, 0))

    flops = 2 * B_pad * (D_IN_PAD * D_H + D_H * D_H + D_H * D_OUT_PAD)
    bytes_accessed = (
        x_p.size * 2 + B_pad * D_OUT_PAD * 4
        + (w1_p.size + w2_p.size + w3_p.size) * 2
        + (b1_p.size + b2_p.size + b3_p.size) * 4
    )
    cost = pl.CostEstimate(
        flops=flops,
        transcendentals=B_pad * D_OUT_PAD,   # tanh
        bytes_accessed=bytes_accessed,
    )

    out_padded = pl.pallas_call(
        generator_kernel,
        out_shape=jax.ShapeDtypeStruct((B_pad, D_OUT_PAD), jnp.float32),
        grid_spec=pltpu.PrefetchScalarGridSpec(
            num_scalar_prefetch=0,
            grid=grid,
            in_specs=in_specs,
            out_specs=out_spec,
        ),
        compiler_params=pltpu.CompilerParams(
            dimension_semantics=("parallel",),
            vmem_limit_bytes=32 * 1024 * 1024,
        ),
        cost_estimate=cost,
    )(x_p, w1_p, b1_p, w2_p, b2_p, w3_p, b3_p)

    return out_padded[:B, :D_OUT]


def init_params(key):
    """Deterministic synthetic init matching nn.Linear shapes (stored transposed)."""
    k1, k2, k3, k4, k5, k6 = jax.random.split(key, 6)

    # PyTorch nn.Linear default init: U(-1/sqrt(fan_in), 1/sqrt(fan_in))
    def lin(kw, kb, fan_in, fan_out):
        bound = 1.0 / jnp.sqrt(fan_in)
        w = jax.random.uniform(kw, (fan_in, fan_out), jnp.float32, -bound, bound)
        b = jax.random.uniform(kb, (1, fan_out), jnp.float32, -bound, bound)
        return w, b

    w1, b1 = lin(k1, k2, D_IN, D_H)
    w2, b2 = lin(k3, k4, D_H, D_H)
    w3, b3 = lin(k5, k6, D_H, D_OUT)
    return (w1, b1, w2, b2, w3, b3)


def reference_forward_f32(x, params):
    w1, b1, w2, b2, w3, b3 = params
    h = jnp.maximum(x @ w1 + b1, 0.0)
    h = jnp.maximum(h @ w2 + b2, 0.0)
    return jnp.tanh(h @ w3 + b3)


def reference_forward_bf16(x, params):
    """Matches the kernel's numerics: bf16 matmul operands, f32 accumulate/activations."""
    w1, b1, w2, b2, w3, b3 = params
    f = lambda a: a.astype(jnp.bfloat16).astype(jnp.float32)
    h = jnp.maximum(f(x) @ f(w1) + b1, 0.0)
    h = jnp.maximum(f(h) @ f(w2) + b2, 0.0)
    return jnp.tanh(f(h) @ f(w3) + b3)


if __name__ == "__main__":
    key = jax.random.PRNGKey(0)
    kx, kp = jax.random.split(key)

    B = 8  # small batch for the built-in test (tile auto-shrinks to 16)
    x = jax.random.normal(kx, (B, D_IN), jnp.float32)  # 100-dim latent noise
    params = init_params(kp)

    out = generator_forward(x, params)
    out = jax.block_until_ready(out)
    assert out.shape == (B, D_OUT)

    ref_bf16 = reference_forward_bf16(x, params)
    ref_f32 = reference_forward_f32(x, params)
    assert jnp.allclose(out, ref_bf16, atol=5e-3, rtol=5e-3), "mismatch vs bf16 reference"
    assert jnp.allclose(out, ref_f32, atol=5e-2, rtol=5e-2), "mismatch vs f32 reference"

    print("KERNEL_OK")
</pallas_src>

<mosaic_0001>
module attributes {stable_mosaic.version = 11 : i64} {
  func.func @generator_kernel(%arg0: i32, %arg1: memref<16x128xbf16, #tpu.memory_space<vmem>>, %arg2: memref<128x256xbf16, #tpu.memory_space<vmem>>, %arg3: memref<1x256xf32, #tpu.memory_space<vmem>>, %arg4: memref<256x256xbf16, #tpu.memory_space<vmem>>, %arg5: memref<1x256xf32, #tpu.memory_space<vmem>>, %arg6: memref<256x896xbf16, #tpu.memory_space<vmem>>, %arg7: memref<1x896xf32, #tpu.memory_space<vmem>>, %arg8: memref<16x896xf32, #tpu.memory_space<vmem>>) attributes {dimension_semantics = [#tpu.dimension_semantics<parallel>], iteration_bounds = array<i64: 1>, scalar_prefetch = 0 : i64, scratch_operands = 0 : i64, tpu.core_type = #tpu.core_type<tc>, window_params = [{transform_indices = @transform_0, window_bounds = array<i64: 16, 128>}, {pipeline_mode = #tpu.pipeline_mode<synchronous>, transform_indices = @transform_1, window_bounds = array<i64: 128, 256>}, {pipeline_mode = #tpu.pipeline_mode<synchronous>, transform_indices = @transform_2, window_bounds = array<i64: 1, 256>}, {pipeline_mode = #tpu.pipeline_mode<synchronous>, transform_indices = @transform_3, window_bounds = array<i64: 256, 256>}, {pipeline_mode = #tpu.pipeline_mode<synchronous>, transform_indices = @transform_4, window_bounds = array<i64: 1, 256>}, {pipeline_mode = #tpu.pipeline_mode<synchronous>, transform_indices = @transform_5, window_bounds = array<i64: 256, 896>}, {pipeline_mode = #tpu.pipeline_mode<synchronous>, transform_indices = @transform_6, window_bounds = array<i64: 1, 896>}, {transform_indices = @transform_7, window_bounds = array<i64: 16, 896>}]} {
    %c0 = arith.constant 0 : index
    %c0_0 = arith.constant 0 : index
    %0 = vector.load %arg1[%c0, %c0_0] : memref<16x128xbf16, #tpu.memory_space<vmem>>, vector<16x128xbf16>
    %c0_1 = arith.constant 0 : index
    %c0_2 = arith.constant 0 : index
    %1 = vector.load %arg2[%c0_1, %c0_2] : memref<128x256xbf16, #tpu.memory_space<vmem>>, vector<128x256xbf16>
    %cst = arith.constant dense<0.000000e+00> : vector<16x256xf32>
    %2 = tpu.matmul %0, %1, %cst {dimension_numbers = #tpu.dot_dimension_numbers<[1], [0], [0], [1], [0, 0, 1, 1], [], []>} : vector<16x128xbf16>, vector<128x256xbf16>, vector<16x256xf32> -> vector<16x256xf32>
    %c0_3 = arith.constant 0 : index
    %c0_4 = arith.constant 0 : index
    %3 = vector.load %arg3[%c0_3, %c0_4] : memref<1x256xf32, #tpu.memory_space<vmem>>, vector<1x256xf32>
    %4 = vector.broadcast %3 : vector<1x256xf32> to vector<16x256xf32>
    %5 = arith.addf %2, %4 : vector<16x256xf32>
    %cst_5 = arith.constant 0.000000e+00 : f32
    %6 = vector.broadcast %cst_5 : f32 to vector<16x256xf32>
    %7 = arith.maximumf %5, %6 : vector<16x256xf32>
    %8 = arith.truncf %7 : vector<16x256xf32> to vector<16x256xbf16>
    %c0_6 = arith.constant 0 : index
    %c0_7 = arith.constant 0 : index
    %9 = vector.load %arg4[%c0_6, %c0_7] : memref<256x256xbf16, #tpu.memory_space<vmem>>, vector<256x256xbf16>
    %cst_8 = arith.constant dense<0.000000e+00> : vector<16x256xf32>
    %10 = tpu.matmul %8, %9, %cst_8 {dimension_numbers = #tpu.dot_dimension_numbers<[1], [0], [0], [1], [0, 0, 1, 1], [], []>} : vector<16x256xbf16>, vector<256x256xbf16>, vector<16x256xf32> -> vector<16x256xf32>
    %c0_9 = arith.constant 0 : index
    %c0_10 = arith.constant 0 : index
    %11 = vector.load %arg5[%c0_9, %c0_10] : memref<1x256xf32, #tpu.memory_space<vmem>>, vector<1x256xf32>
    %12 = vector.broadcast %11 : vector<1x256xf32> to vector<16x256xf32>
    %13 = arith.addf %10, %12 : vector<16x256xf32>
    %cst_11 = arith.constant 0.000000e+00 : f32
    %14 = vector.broadcast %cst_11 : f32 to vector<16x256xf32>
    %15 = arith.maximumf %13, %14 : vector<16x256xf32>
    %16 = arith.truncf %15 : vector<16x256xf32> to vector<16x256xbf16>
    %c0_12 = arith.constant 0 : index
    %c0_13 = arith.constant 0 : index
    %17 = vector.load %arg6[%c0_12, %c0_13] : memref<256x896xbf16, #tpu.memory_space<vmem>>, vector<256x896xbf16>
    %cst_14 = arith.constant dense<0.000000e+00> : vector<16x896xf32>
    %18 = tpu.matmul %16, %17, %cst_14 {dimension_numbers = #tpu.dot_dimension_numbers<[1], [0], [0], [1], [0, 0, 1, 1], [], []>} : vector<16x256xbf16>, vector<256x896xbf16>, vector<16x896xf32> -> vector<16x896xf32>
    %c0_15 = arith.constant 0 : index
    %c0_16 = arith.constant 0 : index
    %19 = vector.load %arg7[%c0_15, %c0_16] : memref<1x896xf32, #tpu.memory_space<vmem>>, vector<1x896xf32>
    %20 = vector.broadcast %19 : vector<1x896xf32> to vector<16x896xf32>
    %21 = arith.addf %18, %20 : vector<16x896xf32>
    %22 = math.tanh %21 : vector<16x896xf32>
    %c0_17 = arith.constant 0 : index
    %c0_18 = arith.constant 0 : index
    %23 = vector.load %arg8[%c0_17, %c0_18] : memref<16x896xf32, #tpu.memory_space<vmem>>, vector<16x896xf32>
    tpu.vector_store %arg8[%c0_17, %c0_18], %22 {strides = array<i32>} : memref<16x896xf32, #tpu.memory_space<vmem>>, vector<16x896xf32>,
    return
  }
  func.func @transform_0(%arg0: i32) -> (i32, i32) {
    %c0_i32 = arith.constant 0 : i32
    %c0_i32_0 = arith.constant 0 : i32
    return %arg0, %c0_i32 : i32, i32
  }
  func.func @transform_1(%arg0: i32) -> (i32, i32) {
    %c0_i32 = arith.constant 0 : i32
    %c0_i32_0 = arith.constant 0 : i32
    %c0_i32_1 = arith.constant 0 : i32
    return %c0_i32, %c0_i32_0 : i32, i32
  }
  func.func @transform_2(%arg0: i32) -> (i32, i32) {
    %c0_i32 = arith.constant 0 : i32
    %c0_i32_0 = arith.constant 0 : i32
    %c0_i32_1 = arith.constant 0 : i32
    return %c0_i32, %c0_i32_0 : i32, i32
  }
  func.func @transform_3(%arg0: i32) -> (i32, i32) {
    %c0_i32 = arith.constant 0 : i32
    %c0_i32_0 = arith.constant 0 : i32
    %c0_i32_1 = arith.constant 0 : i32
    return %c0_i32, %c0_i32_0 : i32, i32
  }
  func.func @transform_4(%arg0: i32) -> (i32, i32) {
    %c0_i32 = arith.constant 0 : i32
    %c0_i32_0 = arith.constant 0 : i32
    %c0_i32_1 = arith.constant 0 : i32
    return %c0_i32, %c0_i32_0 : i32, i32
  }
  func.func @transform_5(%arg0: i32) -> (i32, i32) {
    %c0_i32 = arith.constant 0 : i32
    %c0_i32_0 = arith.constant 0 : i32
    %c0_i32_1 = arith.constant 0 : i32
    return %c0_i32, %c0_i32_0 : i32, i32
  }
  func.func @transform_6(%arg0: i32) -> (i32, i32) {
    %c0_i32 = arith.constant 0 : i32
    %c0_i32_0 = arith.constant 0 : i32
    %c0_i32_1 = arith.constant 0 : i32
    return %c0_i32, %c0_i32_0 : i32, i32
  }
  func.func @transform_7(%arg0: i32) -> (i32, i32) {
    %c0_i32 = arith.constant 0 : i32
    %c0_i32_0 = arith.constant 0 : i32
    return %arg0, %c0_i32 : i32, i32
  }
}

</mosaic_0001>

<llo_original>
// kernel: tpu_custom_call.1
$region0: #{tpu_custom_call.1}
  #allocation0 [shape = 'u32[]', space=smem, size = 0x4, offset = 0x4, fixed_abs, tag = 'smem constant byte address 0x4 - core index']
  #allocation1 [shape = 'u32[144,128]{1,0:T(1,128)}', space=vmem, size = 0x12000, scoped, tag = 'internal scratch']
  %s0 = inlined_call_operand.hbm [shape: bf16[16,128], index: 0, kind: input, shape index: {}]
  %s1 = inlined_call_operand.hbm [shape: bf16[128,256], index: 1, kind: input, shape index: {}]
  %s2 = inlined_call_operand.vmem [shape: f32[1,256], index: 2, kind: input, shape index: {}]
  %s3 = inlined_call_operand.hbm [shape: bf16[256,256], index: 3, kind: input, shape index: {}]
  %s4 = inlined_call_operand.hbm [shape: f32[1,256], index: 4, kind: input, shape index: {}]
  %s5 = inlined_call_operand.hbm [shape: bf16[256,896], index: 5, kind: input, shape index: {}]
  %s6 = inlined_call_operand.vmem [shape: f32[1,896], index: 6, kind: input, shape index: {}]
  %s7 = inlined_call_operand.hbm [shape: f32[16,896], index: 7, kind: output, shape index: {}]
  %s8 = sld [smem:[#allocation0]]
  $region58: #{tpu_custom_call.1} parent=0
    _
  %s10 = ssub.s32 1, %s8
  %s11 = scalar_select 0, %s10, %s8
  $region1: #{tpu_custom_call.1} parent=0
    #allocation2 [shape = 'u8[4096]{0}', space=vmem, size = 0x1000, scoped, tag = 'input window, operand 0, single buffered']
    #allocation3 [shape = 's32[1]{0}', space=sflag, size = 0x4, scoped, tag = 'scoped memory for tpu_custom_call.1']
    #allocation4 [shape = 's32[1]{0}', space=sflag, size = 0x4, scoped, tag = 'scoped memory for tpu_custom_call.1']
    #allocation5 [shape = 'u8[65536]{0}', space=vmem, size = 0x10000, scoped, tag = 'input window, operand 1, single buffered']
    #allocation6 [shape = 's32[1]{0}', space=sflag, size = 0x4, scoped, tag = 'scoped memory for tpu_custom_call.1']
    #allocation7 [shape = 'u8[131072]{0}', space=vmem, size = 0x20000, scoped, tag = 'input window, operand 3, single buffered']
    #allocation8 [shape = 'u8[1024]{0}', space=vmem, size = 0x400, scoped, tag = 'input window, operand 4, single buffered']
    #allocation9 [shape = 's32[1]{0}', space=sflag, size = 0x4, scoped, tag = 'scoped memory for tpu_custom_call.1']
    #allocation10 [shape = 'u8[458752]{0}', space=vmem, size = 0x70000, scoped, tag = 'input window, operand 5, single buffered']
    #allocation11 [shape = 'u8[57344]{0}', space=vmem, size = 0xe000, scoped, tag = 'output window, operand 0, single buffered']
    %12 = vsyncpa [#allocation3], 0
    %13 = vsyncpa [#allocation6], 0
    %14 = vsyncpa [#allocation9], 0
    %15 = vsyncpa [#allocation4], 0
    // Predicated region
    $region2: #{tpu_custom_call.1} parent=1 // pred_check
      _
    $region3: #{tpu_custom_call.1} parent=1 // pred_check_branch
      %17 = sbr.rel (0) target = $region5
    $region4: #{tpu_custom_call.1} parent=1 // pred_region
      %s19 = ssub.s32 128, 128
      %20 = vsyncadd [#allocation3], %s19
      %s21 = sshll.u32 [#allocation2], 4
      %s22 = int_to_ptr.vmem [resolvable:$true] %s21
      %27 = dma.hbm_to_vmem [thread:$0]  %s0, 128, %s22, [#allocation3], 64, 64, 4
    $region5: #{tpu_custom_call.1} parent=1 // pred_fallthru
      _
    // Predicated region
    $region6: #{tpu_custom_call.1} parent=1 // pred_check
      _
    $region7: #{tpu_custom_call.1} parent=1 // pred_check_branch
      %29 = sbr.rel (0) target = $region9
    $region8: #{tpu_custom_call.1} parent=1 // pred_region
      %s31 = ssub.s32 2048, 2048
      %32 = vsyncadd [#allocation6], %s31
      %s33 = sshll.u32 [#allocation5], 4
      %s34 = int_to_ptr.vmem [resolvable:$true] %s33
      %39 = dma.hbm_to_vmem [thread:$0]  %s1, 2048, %s34, [#allocation6], 128, 128, 8
    $region9: #{tpu_custom_call.1} parent=1 // pred_fallthru
      _
    // Predicated region
    $region10: #{tpu_custom_call.1} parent=1 // pred_check
      _
    $region11: #{tpu_custom_call.1} parent=1 // pred_check_branch
      %41 = sbr.rel (0) target = $region13
    $region12: #{tpu_custom_call.1} parent=1 // pred_region
      _
    $region13: #{tpu_custom_call.1} parent=1 // pred_fallthru
      _
    // Predicated region
    $region14: #{tpu_custom_call.1} parent=1 // pred_check
      _
    $region15: #{tpu_custom_call.1} parent=1 // pred_check_branch
      %43 = sbr.rel (0) target = $region17
    $region16: #{tpu_custom_call.1} parent=1 // pred_region
      %s45 = ssub.s32 4096, 4096
      %46 = vsyncadd [#allocation6], %s45
      %s47 = sshll.u32 [#allocation7], 4
      %s48 = int_to_ptr.vmem [resolvable:$true] %s47
      %53 = dma.hbm_to_vmem [thread:$0]  %s3, 4096, %s48, [#allocation6], 128, 128, 8
    $region17: #{tpu_custom_call.1} parent=1 // pred_fallthru
      _
    // Predicated region
    $region18: #{tpu_custom_call.1} parent=1 // pred_check
      _
    $region19: #{tpu_custom_call.1} parent=1 // pred_check_branch
      %55 = sbr.rel (0) target = $region21
    $region20: #{tpu_custom_call.1} parent=1 // pred_region
      %s57 = ssub.s32 32, 32
      %58 = vsyncadd [#allocation9], %s57
      %s60 = sshll.u32 [#allocation8], 4
      %s61 = int_to_ptr.vmem [resolvable:$true] %s60
      %63 = dma.hbm_to_vmem [thread:$0]  %s4, 32, %s61, [#allocation9]
    $region21: #{tpu_custom_call.1} parent=1 // pred_fallthru
      _
    // Predicated region
    $region22: #{tpu_custom_call.1} parent=1 // pred_check
      _
    $region23: #{tpu_custom_call.1} parent=1 // pred_check_branch
      %65 = sbr.rel (0) target = $region25
    $region24: #{tpu_custom_call.1} parent=1 // pred_region
      %s67 = ssub.s32 14336, 14336
      %68 = vsyncadd [#allocation9], %s67
      %s69 = sshll.u32 [#allocation10], 4
      %s70 = int_to_ptr.vmem [resolvable:$true] %s69
      %75 = dma.hbm_to_vmem [thread:$0]  %s5, 14336, %s70, [#allocation9], 448, 448, 28
    $region25: #{tpu_custom_call.1} parent=1 // pred_fallthru
      _
    // Predicated region
    $region26: #{tpu_custom_call.1} parent=1 // pred_check
      _
    $region27: #{tpu_custom_call.1} parent=1 // pred_check_branch
      %77 = sbr.rel (0) target = $region29
    $region28: #{tpu_custom_call.1} parent=1 // pred_region
      _
    $region29: #{tpu_custom_call.1} parent=1 // pred_fallthru
      _
    // Predicated region
    $region30: #{tpu_custom_call.1} parent=1 // pred_check
      _
    $region31: #{tpu_custom_call.1} parent=1 // pred_check_branch
      %79 = sbr.rel (0) target = $region33
    $region32: #{tpu_custom_call.1} parent=1 // pred_region
      %80 = dma.done [#allocation3], 128
    $region33: #{tpu_custom_call.1} parent=1 // pred_fallthru
      _
    // Predicated region
    $region34: #{tpu_custom_call.1} parent=1 // pred_check
      _
    $region35: #{tpu_custom_call.1} parent=1 // pred_check_branch
      %82 = sbr.rel (0) target = $region37
    $region36: #{tpu_custom_call.1} parent=1 // pred_region
      %83 = dma.done [#allocation6], 2048
    $region37: #{tpu_custom_call.1} parent=1 // pred_fallthru
      _
    // Predicated region
    $region38: #{tpu_custom_call.1} parent=1 // pred_check
      _
    $region39: #{tpu_custom_call.1} parent=1 // pred_check_branch
      %85 = sbr.rel (0) target = $region41
    $region40: #{tpu_custom_call.1} parent=1 // pred_region
      %86 = dma.done [#allocation6], 4096
    $region41: #{tpu_custom_call.1} parent=1 // pred_fallthru
      _
    // Predicated region
    $region42: #{tpu_custom_call.1} parent=1 // pred_check
      _
    $region43: #{tpu_custom_call.1} parent=1 // pred_check_branch
      %88 = sbr.rel (0) target = $region45
    $region44: #{tpu_custom_call.1} parent=1 // pred_region
      %89 = dma.done [#allocation9], 32
    $region45: #{tpu_custom_call.1} parent=1 // pred_fallthru
      _
    // Predicated region
    $region46: #{tpu_custom_call.1} parent=1 // pred_check
      _
    $region47: #{tpu_custom_call.1} parent=1 // pred_check_branch
      %91 = sbr.rel (0) target = $region49
    $region48: #{tpu_custom_call.1} parent=1 // pred_region
      %92 = dma.done [#allocation9], 14336
    $region49: #{tpu_custom_call.1} parent=1 // pred_fallthru
      _
    %v94 = vld [vmem:[#allocation2] sm:$0xf]
    %v95 = vld [vmem:[#allocation2 + $0x4] sm:$0xf]
    %v96 = vld [vmem:[#allocation5] sm:$0xff]
    %v97 = vld [vmem:[#allocation5 + $0x8] sm:$0xff]
    %v98 = vld [vmem:[#allocation5 + $0x10] sm:$0xff]
    %v99 = vld [vmem:[#allocation5 + $0x18] sm:$0xff]
    %v100 = vld [vmem:[#allocation5 + $0x20] sm:$0xff]
    %v101 = vld [vmem:[#allocation5 + $0x28] sm:$0xff]
    %v102 = vld [vmem:[#allocation5 + $0x30] sm:$0xff]
    %v103 = vld [vmem:[#allocation5 + $0x38] sm:$0xff]
    %v104 = vld [vmem:[#allocation5 + $0x40] sm:$0xff]
    %v105 = vld [vmem:[#allocation5 + $0x48] sm:$0xff]
    %v106 = vld [vmem:[#allocation5 + $0x50] sm:$0xff]
    %v107 = vld [vmem:[#allocation5 + $0x58] sm:$0xff]
    %v108 = vld [vmem:[#allocation5 + $0x60] sm:$0xff]
    %v109 = vld [vmem:[#allocation5 + $0x68] sm:$0xff]
    %v110 = vld [vmem:[#allocation5 + $0x70] sm:$0xff]
    %v111 = vld [vmem:[#allocation5 + $0x78] sm:$0xff]
    %v112 = vld [vmem:[%s2] sm:$0x3]
    %v114 = vlaneseq
    %v115 = vshrl.u32 %v114, 7
    %v116 = vsub.s32 0, %v115
    %v117 = vrot.slane %v112, %v116
    %v118 = vlaneseq
    %v119 = vshrl.u32 %v118, 7
    %v120 = vsub.s32 1, %v119
    %v121 = vrot.slane %v112, %v120
    %v126 = vunpack.c.l.b16 %v94
    %v127 = vunpack.c.l.b16 %v95
    %v128 = vpack.c.b16 %v127, %v126
    %v146 = vunpack.c.l.b16 %v96
    %v147 = vunpack.c.h.b16 %v96
    %v148 = vunpack.c.l.b16 %v97
    %v149 = vunpack.c.h.b16 %v97
    %v150 = vunpack.c.l.b16 %v98
    %v151 = vunpack.c.h.b16 %v98
    %v152 = vunpack.c.l.b16 %v99
    %v153 = vunpack.c.h.b16 %v99
    %v154 = vunpack.c.l.b16 %v100
    %v155 = vunpack.c.h.b16 %v100
    %v156 = vunpack.c.l.b16 %v101
    %v157 = vunpack.c.h.b16 %v101
    %v158 = vunpack.c.l.b16 %v102
    %v159 = vunpack.c.h.b16 %v102
    %v160 = vunpack.c.l.b16 %v103
    %v161 = vunpack.c.h.b16 %v103
    %v162 = vunpack.c.l.b16 %v104
    %v163 = vunpack.c.h.b16 %v104
    %v164 = vunpack.c.l.b16 %v105
    %v165 = vunpack.c.h.b16 %v105
    %v166 = vunpack.c.l.b16 %v106
    %v167 = vunpack.c.h.b16 %v106
    %v168 = vunpack.c.l.b16 %v107
    %v169 = vunpack.c.h.b16 %v107
    %v170 = vunpack.c.l.b16 %v108
    %v171 = vunpack.c.h.b16 %v108
    %v172 = vunpack.c.l.b16 %v109
    %v173 = vunpack.c.h.b16 %v109
    %v174 = vunpack.c.l.b16 %v110
    %v175 = vunpack.c.h.b16 %v110
    %v176 = vunpack.c.l.b16 %v111
    %v177 = vunpack.c.h.b16 %v111
    %v178 = vpack.c.b16 %v148, %v146
    %v179 = vpack.c.b16 %v149, %v147
    %v180 = vpack.c.b16 %v152, %v150
    %v181 = vpack.c.b16 %v153, %v151
    %v182 = vpack.c.b16 %v156, %v154
    %v183 = vpack.c.b16 %v157, %v155
    %v184 = vpack.c.b16 %v160, %v158
    %v185 = vpack.c.b16 %v161, %v159
    %v186 = vpack.c.b16 %v164, %v162
    %v187 = vpack.c.b16 %v165, %v163
    %v188 = vpack.c.b16 %v168, %v166
    %v189 = vpack.c.b16 %v169, %v167
    %v190 = vpack.c.b16 %v172, %v170
    %v191 = vpack.c.b16 %v173, %v171
    %v192 = vpack.c.b16 %v176, %v174
    %v193 = vpack.c.b16 %v177, %v175
    %210 = vmatprep.subr.bf16.mxu0 %v193
    %211 = vmatpush1.bf16.msra.mxu0 %v192
    %212 = vmatprep.subr.bf16.mxu0 %v191
    %213 = vmatpush1.bf16.msra.mxu0 %v190
    %214 = vmatprep.subr.bf16.mxu0 %v189
    %215 = vmatpush1.bf16.msra.mxu0 %v188
    %216 = vmatprep.subr.bf16.mxu0 %v187
    %217 = vmatpush1.bf16.msra.mxu0 %v186
    %218 = vmatprep.subr.bf16.mxu0 %v185
    %219 = vmatpush1.bf16.msra.mxu0 %v184
    %220 = vmatprep.subr.bf16.mxu0 %v183
    %221 = vmatpush1.bf16.msra.mxu0 %v182
    %222 = vmatprep.subr.bf16.mxu0 %v181
    %223 = vmatpush1.bf16.msra.mxu0 %v180
    %224 = vmatprep.subr.bf16.mxu0 %v179
    %225 = vmatpush1.bf16.msra.mxu0 %v178
    %226 = vmatprep.subr.bf16.mxu0 0
    %227 = vmatpush2.bf16.msra.mxu0 0
    %228 = vmatprep.subr.bf16.mxu0 0
    %229 = vmatpush2.bf16.msra.mxu0 0
    %230 = vmatprep.subr.bf16.mxu0 0
    %231 = vmatpush2.bf16.msra.mxu0 0
    %232 = vmatprep.subr.bf16.mxu0 0
    %233 = vmatpush2.bf16.msra.mxu0 0
    %234 = vmatprep.subr.bf16.mxu0 0
    %235 = vmatpush2.bf16.msra.mxu0 0
    %236 = vmatprep.subr.bf16.mxu0 0
    %237 = vmatpush2.bf16.msra.mxu0 0
    %238 = vmatprep.subr.bf16.mxu0 0
    %239 = vmatpush2.bf16.msra.mxu0 0
    %240 = vmatprep.subr.bf16.mxu0 0
    %241 = vmatpush2.bf16.msra.mxu0 0
    %242 = vmatprep.mubr.bf16.mxu0 0
    %243 = vmatmul.mubr.bf16.gmra.mxu0 %v128
    %v244 = vpop.f32.mrf.mxu0
    %v245 = vadd.f32 %v117, %v244
    %v246 = vpop.f32.mrf.mxu0
    %v247 = vadd.f32 %v121, %v246
    %v248 = vpop.f32.mrf.mxu0
    %v249 = vadd.f32 %v117, %v248
    %v250 = vpop.f32.mrf.mxu0
    %v251 = vadd.f32 %v121, %v250
    %252 = vdwg.mxu0
    %v253 = vmax.f32 %v245, 0.0
    %v254 = vmax.f32 %v247, 0.0
    %v255 = vmax.f32 %v249, 0.0
    %v256 = vmax.f32 %v251, 0.0
    %v257 = vpack.c.bf16 %v255, %v253
    %v258 = vpack.c.bf16 %v256, %v254
    %v259 = vld [vmem:[#allocation7] sm:$0xff]
    %v260 = vld [vmem:[#allocation7 + $0x8] sm:$0xff]
    %v261 = vld [vmem:[#allocation7 + $0x10] sm:$0xff]
    %v262 = vld [vmem:[#allocation7 + $0x18] sm:$0xff]
    %v263 = vld [vmem:[#allocation7 + $0x20] sm:$0xff]
    %v264 = vld [vmem:[#allocation7 + $0x28] sm:$0xff]
    %v265 = vld [vmem:[#allocation7 + $0x30] sm:$0xff]
    %v266 = vld [vmem:[#allocation7 + $0x38] sm:$0xff]
    %v267 = vld [vmem:[#allocation7 + $0x40] sm:$0xff]
    %v268 = vld [vmem:[#allocation7 + $0x48] sm:$0xff]
    %v269 = vld [vmem:[#allocation7 + $0x50] sm:$0xff]
    %v270 = vld [vmem:[#allocation7 + $0x58] sm:$0xff]
    %v271 = vld [vmem:[#allocation7 + $0x60] sm:$0xff]
    %v272 = vld [vmem:[#allocation7 + $0x68] sm:$0xff]
    %v273 = vld [vmem:[#allocation7 + $0x70] sm:$0xff]
    %v274 = vld [vmem:[#allocation7 + $0x78] sm:$0xff]
    %v275 = vld [vmem:[#allocation7 + $0x80] sm:$0xff]
    %v276 = vld [vmem:[#allocation7 + $0x88] sm:$0xff]
    %v277 = vld [vmem:[#allocation7 + $0x90] sm:$0xff]
    %v278 = vld [vmem:[#allocation7 + $0x98] sm:$0xff]
    %v279 = vld [vmem:[#allocation7 + $0xa0] sm:$0xff]
    %v280 = vld [vmem:[#allocation7 + $0xa8] sm:$0xff]
    %v281 = vld [vmem:[#allocation7 + $0xb0] sm:$0xff]
    %v282 = vld [vmem:[#allocation7 + $0xb8] sm:$0xff]
    %v283 = vld [vmem:[#allocation7 + $0xc0] sm:$0xff]
    %v284 = vld [vmem:[#allocation7 + $0xc8] sm:$0xff]
    %v285 = vld [vmem:[#allocation7 + $0xd0] sm:$0xff]
    %v286 = vld [vmem:[#allocation7 + $0xd8] sm:$0xff]
    %v287 = vld [vmem:[#allocation7 + $0xe0] sm:$0xff]
    %v288 = vld [vmem:[#allocation7 + $0xe8] sm:$0xff]
    %v289 = vld [vmem:[#allocation7 + $0xf0] sm:$0xff]
    %v290 = vld [vmem:[#allocation7 + $0xf8] sm:$0xff]
    %v291 = vld [vmem:[#allocation8] sm:$0x3]
    %v293 = vlaneseq
    %v294 = vshrl.u32 %v293, 7
    %v295 = vsub.s32 0, %v294
    %v296 = vrot.slane %v291, %v295
    %v297 = vlaneseq
    %v298 = vshrl.u32 %v297, 7
    %v299 = vsub.s32 1, %v298
    %v300 = vrot.slane %v291, %v299
    %v335 = vunpack.c.l.b16 %v259
    %v336 = vunpack.c.h.b16 %v259
    %v337 = vunpack.c.l.b16 %v260
    %v338 = vunpack.c.h.b16 %v260
    %v339 = vunpack.c.l.b16 %v261
    %v340 = vunpack.c.h.b16 %v261
    %v341 = vunpack.c.l.b16 %v262
    %v342 = vunpack.c.h.b16 %v262
    %v343 = vunpack.c.l.b16 %v263
    %v344 = vunpack.c.h.b16 %v263
    %v345 = vunpack.c.l.b16 %v264
    %v346 = vunpack.c.h.b16 %v264
    %v347 = vunpack.c.l.b16 %v265
    %v348 = vunpack.c.h.b16 %v265
    %v349 = vunpack.c.l.b16 %v266
    %v350 = vunpack.c.h.b16 %v266
    %v351 = vunpack.c.l.b16 %v267
    %v352 = vunpack.c.h.b16 %v267
    %v353 = vunpack.c.l.b16 %v268
    %v354 = vunpack.c.h.b16 %v268
    %v355 = vunpack.c.l.b16 %v269
    %v356 = vunpack.c.h.b16 %v269
    %v357 = vunpack.c.l.b16 %v270
    %v358 = vunpack.c.h.b16 %v270
    %v359 = vunpack.c.l.b16 %v271
    %v360 = vunpack.c.h.b16 %v271
    %v361 = vunpack.c.l.b16 %v272
    %v362 = vunpack.c.h.b16 %v272
    %v363 = vunpack.c.l.b16 %v273
    %v364 = vunpack.c.h.b16 %v273
    %v365 = vunpack.c.l.b16 %v274
    %v366 = vunpack.c.h.b16 %v274
    %v367 = vunpack.c.l.b16 %v275
    %v368 = vunpack.c.h.b16 %v275
    %v369 = vunpack.c.l.b16 %v276
    %v370 = vunpack.c.h.b16 %v276
    %v371 = vunpack.c.l.b16 %v277
    %v372 = vunpack.c.h.b16 %v277
    %v373 = vunpack.c.l.b16 %v278
    %v374 = vunpack.c.h.b16 %v278
    %v375 = vunpack.c.l.b16 %v279
    %v376 = vunpack.c.h.b16 %v279
    %v377 = vunpack.c.l.b16 %v280
    %v378 = vunpack.c.h.b16 %v280
    %v379 = vunpack.c.l.b16 %v281
    %v380 = vunpack.c.h.b16 %v281
    %v381 = vunpack.c.l.b16 %v282
    %v382 = vunpack.c.h.b16 %v282
    %v383 = vunpack.c.l.b16 %v283
    %v384 = vunpack.c.h.b16 %v283
    %v385 = vunpack.c.l.b16 %v284
    %v386 = vunpack.c.h.b16 %v284
    %v387 = vunpack.c.l.b16 %v285
    %v388 = vunpack.c.h.b16 %v285
    %v389 = vunpack.c.l.b16 %v286
    %v390 = vunpack.c.h.b16 %v286
    %v391 = vunpack.c.l.b16 %v287
    %v392 = vunpack.c.h.b16 %v287
    %v393 = vunpack.c.l.b16 %v288
    %v394 = vunpack.c.h.b16 %v288
    %v395 = vunpack.c.l.b16 %v289
    %v396 = vunpack.c.h.b16 %v289
    %v397 = vunpack.c.l.b16 %v290
    %v398 = vunpack.c.h.b16 %v290
    %v399 = vpack.c.b16 %v337, %v335
    %v400 = vpack.c.b16 %v338, %v336
    %v401 = vpack.c.b16 %v341, %v339
    %v402 = vpack.c.b16 %v342, %v340
    %v403 = vpack.c.b16 %v345, %v343
    %v404 = vpack.c.b16 %v346, %v344
    %v405 = vpack.c.b16 %v349, %v347
    %v406 = vpack.c.b16 %v350, %v348
    %v407 = vpack.c.b16 %v353, %v351
    %v408 = vpack.c.b16 %v354, %v352
    %v409 = vpack.c.b16 %v357, %v355
    %v410 = vpack.c.b16 %v358, %v356
    %v411 = vpack.c.b16 %v361, %v359
    %v412 = vpack.c.b16 %v362, %v360
    %v413 = vpack.c.b16 %v365, %v363
    %v414 = vpack.c.b16 %v366, %v364
    %v415 = vpack.c.b16 %v369, %v367
    %v416 = vpack.c.b16 %v370, %v368
    %v417 = vpack.c.b16 %v373, %v371
    %v418 = vpack.c.b16 %v374, %v372
    %v419 = vpack.c.b16 %v377, %v375
    %v420 = vpack.c.b16 %v378, %v376
    %v421 = vpack.c.b16 %v381, %v379
    %v422 = vpack.c.b16 %v382, %v380
    %v423 = vpack.c.b16 %v385, %v383
    %v424 = vpack.c.b16 %v386, %v384
    %v425 = vpack.c.b16 %v389, %v387
    %v426 = vpack.c.b16 %v390, %v388
    %v427 = vpack.c.b16 %v393, %v391
    %v428 = vpack.c.b16 %v394, %v392
    %v429 = vpack.c.b16 %v397, %v395
    %v430 = vpack.c.b16 %v398, %v396
    %463 = vmatprep.subr.bf16.mxu0 %v414
    %464 = vmatpush1.bf16.msra.mxu0 %v413
    %465 = vmatprep.subr.bf16.mxu0 %v412
    %466 = vmatpush1.bf16.msra.mxu0 %v411
    %467 = vmatprep.subr.bf16.mxu0 %v410
    %468 = vmatpush1.bf16.msra.mxu0 %v409
    %469 = vmatprep.subr.bf16.mxu0 %v408
    %470 = vmatpush1.bf16.msra.mxu0 %v407
    %471 = vmatprep.subr.bf16.mxu0 %v406
    %472 = vmatpush1.bf16.msra.mxu0 %v405
    %473 = vmatprep.subr.bf16.mxu0 %v404
    %474 = vmatpush1.bf16.msra.mxu0 %v403
    %475 = vmatprep.subr.bf16.mxu0 %v402
    %476 = vmatpush1.bf16.msra.mxu0 %v401
    %477 = vmatprep.subr.bf16.mxu0 %v400
    %478 = vmatpush1.bf16.msra.mxu0 %v399
    %479 = vmatprep.subr.bf16.mxu0 %v430
    %480 = vmatpush2.bf16.msra.mxu0 %v429
    %481 = vmatprep.subr.bf16.mxu0 %v428
    %482 = vmatpush2.bf16.msra.mxu0 %v427
    %483 = vmatprep.subr.bf16.mxu0 %v426
    %484 = vmatpush2.bf16.msra.mxu0 %v425
    %485 = vmatprep.subr.bf16.mxu0 %v424
    %486 = vmatpush2.bf16.msra.mxu0 %v423
    %487 = vmatprep.subr.bf16.mxu0 %v422
    %488 = vmatpush2.bf16.msra.mxu0 %v421
    %489 = vmatprep.subr.bf16.mxu0 %v420
    %490 = vmatpush2.bf16.msra.mxu0 %v419
    %491 = vmatprep.subr.bf16.mxu0 %v418
    %492 = vmatpush2.bf16.msra.mxu0 %v417
    %493 = vmatprep.subr.bf16.mxu0 %v416
    %494 = vmatpush2.bf16.msra.mxu0 %v415
    %495 = vmatprep.mubr.bf16.mxu0 %v258
    %496 = vmatmul.mubr.bf16.gmra.mxu0 %v257
    %v497 = vpop.f32.mrf.mxu0
    %v498 = vadd.f32 %v296, %v497
    %v499 = vpop.f32.mrf.mxu0
    %v500 = vadd.f32 %v300, %v499
    %v501 = vpop.f32.mrf.mxu0
    %v502 = vadd.f32 %v296, %v501
    %v503 = vpop.f32.mrf.mxu0
    %v504 = vadd.f32 %v300, %v503
    %505 = vdwg.mxu0
    %v506 = vmax.f32 %v498, 0.0
    %v507 = vmax.f32 %v500, 0.0
    %v508 = vmax.f32 %v502, 0.0
    %v509 = vmax.f32 %v504, 0.0
    %v510 = vpack.c.bf16 %v508, %v506
    %v511 = vpack.c.bf16 %v509, %v507
    %v512 = vld [vmem:[#allocation10] sm:$0xff]
    %v513 = vld [vmem:[#allocation10 + $0x8] sm:$0xff]
    %v514 = vld [vmem:[#allocation10 + $0x10] sm:$0xff]
    %v515 = vld [vmem:[#allocation10 + $0x18] sm:$0xf]
    %v516 = vld [vmem:[#allocation10 + $0x1c] sm:$0xff]
    %v517 = vld [vmem:[#allocation10 + $0x24] sm:$0xff]
    %v518 = vld [vmem:[#allocation10 + $0x2c] sm:$0xff]
    %v519 = vld [vmem:[#allocation10 + $0x34] sm:$0xf]
    %v520 = vld [vmem:[#allocation10 + $0x38] sm:$0xff]
    %v521 = vld [vmem:[#allocation10 + $0x40] sm:$0xff]
    %v522 = vld [vmem:[#allocation10 + $0x48] sm:$0xff]
    %v523 = vld [vmem:[#allocation10 + $0x50] sm:$0xf]
    %v524 = vld [vmem:[#allocation10 + $0x54] sm:$0xff]
    %v525 = vld [vmem:[#allocation10 + $0x5c] sm:$0xff]
    %v526 = vld [vmem:[#allocation10 + $0x64] sm:$0xff]
    %v527 = vld [vmem:[#allocation10 + $0x6c] sm:$0xf]
    %v528 = vld [vmem:[#allocation10 + $0x70] sm:$0xff]
    %v529 = vld [vmem:[#allocation10 + $0x78] sm:$0xff]
    %v530 = vld [vmem:[#allocation10 + $0x80] sm:$0xff]
    %v531 = vld [vmem:[#allocation10 + $0x88] sm:$0xf]
    %v532 = vld [vmem:[#allocation10 + $0x8c] sm:$0xff]
    %v533 = vld [vmem:[#allocation10 + $0x94] sm:$0xff]
    %v534 = vld [vmem:[#allocation10 + $0x9c] sm:$0xff]
    %v535 = vld [vmem:[#allocation10 + $0xa4] sm:$0xf]
    %v536 = vld [vmem:[#allocation10 + $0xa8] sm:$0xff]
    %v537 = vld [vmem:[#allocation10 + $0xb0] sm:$0xff]
    %v538 = vld [vmem:[#allocation10 + $0xb8] sm:$0xff]
    %v539 = vld [vmem:[#allocation10 + $0xc0] sm:$0xf]
    %v540 = vld [vmem:[#allocation10 + $0xc4] sm:$0xff]
    %v541 = vld [vmem:[#allocation10 + $0xcc] sm:$0xff]
    %v542 = vld [vmem:[#allocation10 + $0xd4] sm:$0xff]
    %v543 = vld [vmem:[#allocation10 + $0xdc] sm:$0xf]
    %v544 = vld [vmem:[#allocation10 + $0xe0] sm:$0xff]
    %v545 = vld [vmem:[#allocation10 + $0xe8] sm:$0xff]
    %v546 = vld [vmem:[#allocation10 + $0xf0] sm:$0xff]
    %v547 = vld [vmem:[#allocation10 + $0xf8] sm:$0xf]
    %v548 = vld [vmem:[#allocation10 + $0xfc] sm:$0xff]
    %v549 = vld [vmem:[#allocation10 + $0x104] sm:$0xff]
    %v550 = vld [vmem:[#allocation10 + $0x10c] sm:$0xff]
    %v551 = vld [vmem:[#allocation10 + $0x114] sm:$0xf]
    %v552 = vld [vmem:[#allocation10 + $0x118] sm:$0xff]
    %v553 = vld [vmem:[#allocation10 + $0x120] sm:$0xff]
    %v554 = vld [vmem:[#allocation10 + $0x128] sm:$0xff]
    %v555 = vld [vmem:[#allocation10 + $0x130] sm:$0xf]
    %v556 = vld [vmem:[#allocation10 + $0x134] sm:$0xff]
    %v557 = vld [vmem:[#allocation10 + $0x13c] sm:$0xff]
    %v558 = vld [vmem:[#allocation10 + $0x144] sm:$0xff]
    %v559 = vld [vmem:[#allocation10 + $0x14c] sm:$0xf]
    %v560 = vld [vmem:[#allocation10 + $0x150] sm:$0xff]
    %v561 = vld [vmem:[#allocation10 + $0x158] sm:$0xff]
    %v562 = vld [vmem:[#allocation10 + $0x160] sm:$0xff]
    %v563 = vld [vmem:[#allocation10 + $0x168] sm:$0xf]
    %v564 = vld [vmem:[#allocation10 + $0x16c] sm:$0xff]
    %v565 = vld [vmem:[#allocation10 + $0x174] sm:$0xff]
    %v566 = vld [vmem:[#allocation10 + $0x17c] sm:$0xff]
    %v567 = vld [vmem:[#allocation10 + $0x184] sm:$0xf]
    %v568 = vld [vmem:[#allocation10 + $0x188] sm:$0xff]
    %v569 = vld [vmem:[#allocation10 + $0x190] sm:$0xff]
    %v570 = vld [vmem:[#allocation10 + $0x198] sm:$0xff]
    %v571 = vld [vmem:[#allocation10 + $0x1a0] sm:$0xf]
    %v572 = vld [vmem:[#allocation10 + $0x1a4] sm:$0xff]
    %v573 = vld [vmem:[#allocation10 + $0x1ac] sm:$0xff]
    %v574 = vld [vmem:[#allocation10 + $0x1b4] sm:$0xff]
    %v575 = vld [vmem:[#allocation10 + $0x1bc] sm:$0xf]
    %v576 = vld [vmem:[#allocation10 + $0x1c0] sm:$0xff]
    %v577 = vld [vmem:[#allocation10 + $0x1c8] sm:$0xff]
    %v578 = vld [vmem:[#allocation10 + $0x1d0] sm:$0xff]
    %v579 = vld [vmem:[#allocation10 + $0x1d8] sm:$0xf]
    %v580 = vld [vmem:[#allocation10 + $0x1dc] sm:$0xff]
    %v581 = vld [vmem:[#allocation10 + $0x1e4] sm:$0xff]
    %v582 = vld [vmem:[#allocation10 + $0x1ec] sm:$0xff]
    %v583 = vld [vmem:[#allocation10 + $0x1f4] sm:$0xf]
    %v584 = vld [vmem:[#allocation10 + $0x1f8] sm:$0xff]
    %v585 = vld [vmem:[#allocation10 + $0x200] sm:$0xff]
    %v586 = vld [vmem:[#allocation10 + $0x208] sm:$0xff]
    %v587 = vld [vmem:[#allocation10 + $0x210] sm:$0xf]
    %v588 = vld [vmem:[#allocation10 + $0x214] sm:$0xff]
    %v589 = vld [vmem:[#allocation10 + $0x21c] sm:$0xff]
    %v590 = vld [vmem:[#allocation10 + $0x224] sm:$0xff]
    %v591 = vld [vmem:[#allocation10 + $0x22c] sm:$0xf]
    %v592 = vld [vmem:[#allocation10 + $0x230] sm:$0xff]
    %v593 = vld [vmem:[#allocation10 + $0x238] sm:$0xff]
    %v594 = vld [vmem:[#allocation10 + $0x240] sm:$0xff]
    %v595 = vld [vmem:[#allocation10 + $0x248] sm:$0xf]
    %v596 = vld [vmem:[#allocation10 + $0x24c] sm:$0xff]
    %v597 = vld [vmem:[#allocation10 + $0x254] sm:$0xff]
    %v598 = vld [vmem:[#allocation10 + $0x25c] sm:$0xff]
    %v599 = vld [vmem:[#allocation10 + $0x264] sm:$0xf]
    %v600 = vld [vmem:[#allocation10 + $0x268] sm:$0xff]
    %v601 = vld [vmem:[#allocation10 + $0x270] sm:$0xff]
    %v602 = vld [vmem:[#allocation10 + $0x278] sm:$0xff]
    %v603 = vld [vmem:[#allocation10 + $0x280] sm:$0xf]
    %v604 = vld [vmem:[#allocation10 + $0x284] sm:$0xff]
    %v605 = vld [vmem:[#allocation10 + $0x28c] sm:$0xff]
    %v606 = vld [vmem:[#allocation10 + $0x294] sm:$0xff]
    %v607 = vld [vmem:[#allocation10 + $0x29c] sm:$0xf]
    %v608 = vld [vmem:[#allocation10 + $0x2a0] sm:$0xff]
    %v609 = vld [vmem:[#allocation10 + $0x2a8] sm:$0xff]
    %v610 = vld [vmem:[#allocation10 + $0x2b0] sm:$0xff]
    %v611 = vld [vmem:[#allocation10 + $0x2b8] sm:$0xf]
    %v612 = vld [vmem:[#allocation10 + $0x2bc] sm:$0xff]
    %v613 = vld [vmem:[#allocation10 + $0x2c4] sm:$0xff]
    %v614 = vld [vmem:[#allocation10 + $0x2cc] sm:$0xff]
    %v615 = vld [vmem:[#allocation10 + $0x2d4] sm:$0xf]
    %v616 = vld [vmem:[#allocation10 + $0x2d8] sm:$0xff]
    %v617 = vld [vmem:[#allocation10 + $0x2e0] sm:$0xff]
    %v618 = vld [vmem:[#allocation10 + $0x2e8] sm:$0xff]
    %v619 = vld [vmem:[#allocation10 + $0x2f0] sm:$0xf]
    %v620 = vld [vmem:[#allocation10 + $0x2f4] sm:$0xff]
    %v621 = vld [vmem:[#allocation10 + $0x2fc] sm:$0xff]
    %v622 = vld [vmem:[#allocation10 + $0x304] sm:$0xff]
    %v623 = vld [vmem:[#allocation10 + $0x30c] sm:$0xf]
    %v624 = vld [vmem:[#allocation10 + $0x310] sm:$0xff]
    %v625 = vld [vmem:[#allocation10 + $0x318] sm:$0xff]
    %v626 = vld [vmem:[#allocation10 + $0x320] sm:$0xff]
    %v627 = vld [vmem:[#allocation10 + $0x328] sm:$0xf]
    %v628 = vld [vmem:[#allocation10 + $0x32c] sm:$0xff]
    %v629 = vld [vmem:[#allocation10 + $0x334] sm:$0xff]
    %v630 = vld [vmem:[#allocation10 + $0x33c] sm:$0xff]
    %v631 = vld [vmem:[#allocation10 + $0x344] sm:$0xf]
    %v632 = vld [vmem:[#allocation10 + $0x348] sm:$0xff]
    %v633 = vld [vmem:[#allocation10 + $0x350] sm:$0xff]
    %v634 = vld [vmem:[#allocation10 + $0x358] sm:$0xff]
    %v635 = vld [vmem:[#allocation10 + $0x360] sm:$0xf]
    %v636 = vld [vmem:[#allocation10 + $0x364] sm:$0xff]
    %v637 = vld [vmem:[#allocation10 + $0x36c] sm:$0xff]
    %v638 = vld [vmem:[#allocation10 + $0x374] sm:$0xff]
    %v639 = vld [vmem:[#allocation10 + $0x37c] sm:$0xf]
    %v640 = vld [vmem:[%s6] sm:$0xff]
    %v642 = vlaneseq
    %v643 = vshrl.u32 %v642, 7
    %v644 = vsub.s32 0, %v643
    %v645 = vrot.slane %v640, %v644
    %v646 = vlaneseq
    %v647 = vshrl.u32 %v646, 7
    %v648 = vsub.s32 1, %v647
    %v649 = vrot.slane %v640, %v648
    %v650 = vlaneseq
    %v651 = vshrl.u32 %v650, 7
    %v652 = vsub.s32 2, %v651
    %v653 = vrot.slane %v640, %v652
    %v654 = vlaneseq
    %v655 = vshrl.u32 %v654, 7
    %v656 = vsub.s32 3, %v655
    %v657 = vrot.slane %v640, %v656
    %v658 = vlaneseq
    %v659 = vshrl.u32 %v658, 7
    %v660 = vsub.s32 4, %v659
    %v661 = vrot.slane %v640, %v660
    %v662 = vlaneseq
    %v663 = vshrl.u32 %v662, 7
    %v664 = vsub.s32 5, %v663
    %v665 = vrot.slane %v640, %v664
    %v666 = vlaneseq
    %v667 = vshrl.u32 %v666, 7
    %v668 = vsub.s32 6, %v667
    %v669 = vrot.slane %v640, %v668
    %v805 = vunpack.c.l.b16 %v512
    %v806 = vunpack.c.h.b16 %v512
    %v807 = vunpack.c.l.b16 %v513
    %v808 = vunpack.c.h.b16 %v513
    %v809 = vunpack.c.l.b16 %v514
    %v810 = vunpack.c.h.b16 %v514
    %v811 = vunpack.c.l.b16 %v515
    %v812 = vunpack.c.l.b16 %v516
    %v813 = vunpack.c.h.b16 %v516
    %v814 = vunpack.c.l.b16 %v517
    %v815 = vunpack.c.h.b16 %v517
    %v816 = vunpack.c.l.b16 %v518
    %v817 = vunpack.c.h.b16 %v518
    %v818 = vunpack.c.l.b16 %v519
    %v819 = vunpack.c.l.b16 %v520
    %v820 = vunpack.c.h.b16 %v520
    %v821 = vunpack.c.l.b16 %v521
    %v822 = vunpack.c.h.b16 %v521
    %v823 = vunpack.c.l.b16 %v522
    %v824 = vunpack.c.h.b16 %v522
    %v825 = vunpack.c.l.b16 %v523
    %v826 = vunpack.c.l.b16 %v524
    %v827 = vunpack.c.h.b16 %v524
    %v828 = vunpack.c.l.b16 %v525
    %v829 = vunpack.c.h.b16 %v525
    %v830 = vunpack.c.l.b16 %v526
    %v831 = vunpack.c.h.b16 %v526
    %v832 = vunpack.c.l.b16 %v527
    %v833 = vunpack.c.l.b16 %v528
    %v834 = vunpack.c.h.b16 %v528
    %v835 = vunpack.c.l.b16 %v529
    %v836 = vunpack.c.h.b16 %v529
    %v837 = vunpack.c.l.b16 %v530
    %v838 = vunpack.c.h.b16 %v530
    %v839 = vunpack.c.l.b16 %v531
    %v840 = vunpack.c.l.b16 %v532
    %v841 = vunpack.c.h.b16 %v532
    %v842 = vunpack.c.l.b16 %v533
    %v843 = vunpack.c.h.b16 %v533
    %v844 = vunpack.c.l.b16 %v534
    %v845 = vunpack.c.h.b16 %v534
    %v846 = vunpack.c.l.b16 %v535
    %v847 = vunpack.c.l.b16 %v536
    %v848 = vunpack.c.h.b16 %v536
    %v849 = vunpack.c.l.b16 %v537
    %v850 = vunpack.c.h.b16 %v537
    %v851 = vunpack.c.l.b16 %v538
    %v852 = vunpack.c.h.b16 %v538
    %v853 = vunpack.c.l.b16 %v539
    %v854 = vunpack.c.l.b16 %v540
    %v855 = vunpack.c.h.b16 %v540
    %v856 = vunpack.c.l.b16 %v541
    %v857 = vunpack.c.h.b16 %v541
    %v858 = vunpack.c.l.b16 %v542
    %v859 = vunpack.c.h.b16 %v542
    %v860 = vunpack.c.l.b16 %v543
    %v861 = vunpack.c.l.b16 %v544
    %v862 = vunpack.c.h.b16 %v544
    %v863 = vunpack.c.l.b16 %v545
    %v864 = vunpack.c.h.b16 %v545
    %v865 = vunpack.c.l.b16 %v546
    %v866 = vunpack.c.h.b16 %v546
    %v867 = vunpack.c.l.b16 %v547
    %v868 = vunpack.c.l.b16 %v548
    %v869 = vunpack.c.h.b16 %v548
    %v870 = vunpack.c.l.b16 %v549
    %v871 = vunpack.c.h.b16 %v549
    %v872 = vunpack.c.l.b16 %v550
    %v873 = vunpack.c.h.b16 %v550
    %v874 = vunpack.c.l.b16 %v551
    %v875 = vunpack.c.l.b16 %v552
    %v876 = vunpack.c.h.b16 %v552
    %v877 = vunpack.c.l.b16 %v553
    %v878 = vunpack.c.h.b16 %v553
    %v879 = vunpack.c.l.b16 %v554
    %v880 = vunpack.c.h.b16 %v554
    %v881 = vunpack.c.l.b16 %v555
    %v882 = vunpack.c.l.b16 %v556
    %v883 = vunpack.c.h.b16 %v556
    %v884 = vunpack.c.l.b16 %v557
    %v885 = vunpack.c.h.b16 %v557
    %v886 = vunpack.c.l.b16 %v558
    %v887 = vunpack.c.h.b16 %v558
    %v888 = vunpack.c.l.b16 %v559
    %v889 = vunpack.c.l.b16 %v560
    %v890 = vunpack.c.h.b16 %v560
    %v891 = vunpack.c.l.b16 %v561
    %v892 = vunpack.c.h.b16 %v561
    %v893 = vunpack.c.l.b16 %v562
    %v894 = vunpack.c.h.b16 %v562
    %v895 = vunpack.c.l.b16 %v563
    %v896 = vunpack.c.l.b16 %v564
    %v897 = vunpack.c.h.b16 %v564
    %v898 = vunpack.c.l.b16 %v565
    %v899 = vunpack.c.h.b16 %v565
    %v900 = vunpack.c.l.b16 %v566
    %v901 = vunpack.c.h.b16 %v566
    %v902 = vunpack.c.l.b16 %v567
    %v903 = vunpack.c.l.b16 %v568
    %v904 = vunpack.c.h.b16 %v568
    %v905 = vunpack.c.l.b16 %v569
    %v906 = vunpack.c.h.b16 %v569
    %v907 = vunpack.c.l.b16 %v570
    %v908 = vunpack.c.h.b16 %v570
    %v909 = vunpack.c.l.b16 %v571
    %v910 = vunpack.c.l.b16 %v572
    %v911 = vunpack.c.h.b16 %v572
    %v912 = vunpack.c.l.b16 %v573
    %v913 = vunpack.c.h.b16 %v573
    %v914 = vunpack.c.l.b16 %v574
    %v915 = vunpack.c.h.b16 %v574
    %v916 = vunpack.c.l.b16 %v575
    %v917 = vunpack.c.l.b16 %v576
    %v918 = vunpack.c.h.b16 %v576
    %v919 = vunpack.c.l.b16 %v577
    %v920 = vunpack.c.h.b16 %v577
    %v921 = vunpack.c.l.b16 %v578
    %v922 = vunpack.c.h.b16 %v578
    %v923 = vunpack.c.l.b16 %v579
    %v924 = vunpack.c.l.b16 %v580
    %v925 = vunpack.c.h.b16 %v580
    %v926 = vunpack.c.l.b16 %v581
    %v927 = vunpack.c.h.b16 %v581
    %v928 = vunpack.c.l.b16 %v582
    %v929 = vunpack.c.h.b16 %v582
    %v930 = vunpack.c.l.b16 %v583
    %v931 = vunpack.c.l.b16 %v584
    %v932 = vunpack.c.h.b16 %v584
    %v933 = vunpack.c.l.b16 %v585
    %v934 = vunpack.c.h.b16 %v585
    %v935 = vunpack.c.l.b16 %v586
    %v936 = vunpack.c.h.b16 %v586
    %v937 = vunpack.c.l.b16 %v587
    %v938 = vunpack.c.l.b16 %v588
    %v939 = vunpack.c.h.b16 %v588
    %v940 = vunpack.c.l.b16 %v589
    %v941 = vunpack.c.h.b16 %v589
    %v942 = vunpack.c.l.b16 %v590
    %v943 = vunpack.c.h.b16 %v590
    %v944 = vunpack.c.l.b16 %v591
    %v945 = vunpack.c.l.b16 %v592
    %v946 = vunpack.c.h.b16 %v592
    %v947 = vunpack.c.l.b16 %v593
    %v948 = vunpack.c.h.b16 %v593
    %v949 = vunpack.c.l.b16 %v594
    %v950 = vunpack.c.h.b16 %v594
    %v951 = vunpack.c.l.b16 %v595
    %v952 = vunpack.c.l.b16 %v596
    %v953 = vunpack.c.h.b16 %v596
    %v954 = vunpack.c.l.b16 %v597
    %v955 = vunpack.c.h.b16 %v597
    %v956 = vunpack.c.l.b16 %v598
    %v957 = vunpack.c.h.b16 %v598
    %v958 = vunpack.c.l.b16 %v599
    %v959 = vunpack.c.l.b16 %v600
    %v960 = vunpack.c.h.b16 %v600
    %v961 = vunpack.c.l.b16 %v601
    %v962 = vunpack.c.h.b16 %v601
    %v963 = vunpack.c.l.b16 %v602
    %v964 = vunpack.c.h.b16 %v602
    %v965 = vunpack.c.l.b16 %v603
    %v966 = vunpack.c.l.b16 %v604
    %v967 = vunpack.c.h.b16 %v604
    %v968 = vunpack.c.l.b16 %v605
    %v969 = vunpack.c.h.b16 %v605
    %v970 = vunpack.c.l.b16 %v606
    %v971 = vunpack.c.h.b16 %v606
    %v972 = vunpack.c.l.b16 %v607
    %v973 = vunpack.c.l.b16 %v608
    %v974 = vunpack.c.h.b16 %v608
    %v975 = vunpack.c.l.b16 %v609
    %v976 = vunpack.c.h.b16 %v609
    %v977 = vunpack.c.l.b16 %v610
    %v978 = vunpack.c.h.b16 %v610
    %v979 = vunpack.c.l.b16 %v611
    %v980 = vunpack.c.l.b16 %v612
    %v981 = vunpack.c.h.b16 %v612
    %v982 = vunpack.c.l.b16 %v613
    %v983 = vunpack.c.h.b16 %v613
    %v984 = vunpack.c.l.b16 %v614
    %v985 = vunpack.c.h.b16 %v614
    %v986 = vunpack.c.l.b16 %v615
    %v987 = vunpack.c.l.b16 %v616
    %v988 = vunpack.c.h.b16 %v616
    %v989 = vunpack.c.l.b16 %v617
    %v990 = vunpack.c.h.b16 %v617
    %v991 = vunpack.c.l.b16 %v618
    %v992 = vunpack.c.h.b16 %v618
    %v993 = vunpack.c.l.b16 %v619
    %v994 = vunpack.c.l.b16 %v620
    %v995 = vunpack.c.h.b16 %v620
    %v996 = vunpack.c.l.b16 %v621
    %v997 = vunpack.c.h.b16 %v621
    %v998 = vunpack.c.l.b16 %v622
    %v999 = vunpack.c.h.b16 %v622
    %v1000 = vunpack.c.l.b16 %v623
    %v1001 = vunpack.c.l.b16 %v624
    %v1002 = vunpack.c.h.b16 %v624
    %v1003 = vunpack.c.l.b16 %v625
    %v1004 = vunpack.c.h.b16 %v625
    %v1005 = vunpack.c.l.b16 %v626
    %v1006 = vunpack.c.h.b16 %v626
    %v1007 = vunpack.c.l.b16 %v627
    %v1008 = vunpack.c.l.b16 %v628
    %v1009 = vunpack.c.h.b16 %v628
    %v1010 = vunpack.c.l.b16 %v629
    %v1011 = vunpack.c.h.b16 %v629
    %v1012 = vunpack.c.l.b16 %v630
    %v1013 = vunpack.c.h.b16 %v630
    %v1014 = vunpack.c.l.b16 %v631
    %v1015 = vunpack.c.l.b16 %v632
    %v1016 = vunpack.c.h.b16 %v632
    %v1017 = vunpack.c.l.b16 %v633
    %v1018 = vunpack.c.h.b16 %v633
    %v1019 = vunpack.c.l.b16 %v634
    %v1020 = vunpack.c.h.b16 %v634
    %v1021 = vunpack.c.l.b16 %v635
    %v1022 = vunpack.c.l.b16 %v636
    %v1023 = vunpack.c.h.b16 %v636
    %v1024 = vunpack.c.l.b16 %v637
    %v1025 = vunpack.c.h.b16 %v637
    %v1026 = vunpack.c.l.b16 %v638
    %v1027 = vunpack.c.h.b16 %v638
    %v1028 = vunpack.c.l.b16 %v639
    %v1029 = vpack.c.b16 %v812, %v805
    %v1030 = vpack.c.b16 %v813, %v806
    %v1031 = vpack.c.b16 %v814, %v807
    %v1032 = vpack.c.b16 %v815, %v808
    %v1033 = vpack.c.b16 %v816, %v809
    %v1034 = vpack.c.b16 %v817, %v810
    %v1035 = vpack.c.b16 %v818, %v811
    %v1036 = vpack.c.b16 %v826, %v819
    %v1037 = vpack.c.b16 %v827, %v820
    %v1038 = vpack.c.b16 %v828, %v821
    %v1039 = vpack.c.b16 %v829, %v822
    %v1040 = vpack.c.b16 %v830, %v823
    %v1041 = vpack.c.b16 %v831, %v824
    %v1042 = vpack.c.b16 %v832, %v825
    %v1043 = vpack.c.b16 %v840, %v833
    %v1044 = vpack.c.b16 %v841, %v834
    %v1045 = vpack.c.b16 %v842, %v835
    %v1046 = vpack.c.b16 %v843, %v836
    %v1047 = vpack.c.b16 %v844, %v837
    %v1048 = vpack.c.b16 %v845, %v838
    %v1049 = vpack.c.b16 %v846, %v839
    %v1050 = vpack.c.b16 %v854, %v847
    %v1051 = vpack.c.b16 %v855, %v848
    %v1052 = vpack.c.b16 %v856, %v849
    %v1053 = vpack.c.b16 %v857, %v850
    %v1054 = vpack.c.b16 %v858, %v851
    %v1055 = vpack.c.b16 %v859, %v852
    %v1056 = vpack.c.b16 %v860, %v853
    %v1057 = vpack.c.b16 %v868, %v861
    %v1058 = vpack.c.b16 %v869, %v862
    %v1059 = vpack.c.b16 %v870, %v863
    %v1060 = vpack.c.b16 %v871, %v864
    %v1061 = vpack.c.b16 %v872, %v865
    %v1062 = vpack.c.b16 %v873, %v866
    %v1063 = vpack.c.b16 %v874, %v867
    %v1064 = vpack.c.b16 %v882, %v875
    %v1065 = vpack.c.b16 %v883, %v876
    %v1066 = vpack.c.b16 %v884, %v877
    %v1067 = vpack.c.b16 %v885, %v878
    %v1068 = vpack.c.b16 %v886, %v879
    %v1069 = vpack.c.b16 %v887, %v880
    %v1070 = vpack.c.b16 %v888, %v881
    %v1071 = vpack.c.b16 %v896, %v889
    %v1072 = vpack.c.b16 %v897, %v890
    %v1073 = vpack.c.b16 %v898, %v891
    %v1074 = vpack.c.b16 %v899, %v892
    %v1075 = vpack.c.b16 %v900, %v893
    %v1076 = vpack.c.b16 %v901, %v894
    %v1077 = vpack.c.b16 %v902, %v895
    %v1078 = vpack.c.b16 %v910, %v903
    %v1079 = vpack.c.b16 %v911, %v904
    %v1080 = vpack.c.b16 %v912, %v905
    %v1081 = vpack.c.b16 %v913, %v906
    %v1082 = vpack.c.b16 %v914, %v907
    %v1083 = vpack.c.b16 %v915, %v908
    %v1084 = vpack.c.b16 %v916, %v909
    %v1085 = vpack.c.b16 %v924, %v917
    %v1086 = vpack.c.b16 %v925, %v918
    %v1087 = vpack.c.b16 %v926, %v919
    %v1088 = vpack.c.b16 %v927, %v920
    %v1089 = vpack.c.b16 %v928, %v921
    %v1090 = vpack.c.b16 %v929, %v922
    %v1091 = vpack.c.b16 %v930, %v923
    %v1092 = vpack.c.b16 %v938, %v931
    %v1093 = vpack.c.b16 %v939, %v932
    %v1094 = vpack.c.b16 %v940, %v933
    %v1095 = vpack.c.b16 %v941, %v934
    %v1096 = vpack.c.b16 %v942, %v935
    %v1097 = vpack.c.b16 %v943, %v936
    %v1098 = vpack.c.b16 %v944, %v937
    %v1099 = vpack.c.b16 %v952, %v945
    %v1100 = vpack.c.b16 %v953, %v946
    %v1101 = vpack.c.b16 %v954, %v947
    %v1102 = vpack.c.b16 %v955, %v948
    %v1103 = vpack.c.b16 %v956, %v949
    %v1104 = vpack.c.b16 %v957, %v950
    %v1105 = vpack.c.b16 %v958, %v951
    %v1106 = vpack.c.b16 %v966, %v959
    %v1107 = vpack.c.b16 %v967, %v960
    %v1108 = vpack.c.b16 %v968, %v961
    %v1109 = vpack.c.b16 %v969, %v962
    %v1110 = vpack.c.b16 %v970, %v963
    %v1111 = vpack.c.b16 %v971, %v964
    %v1112 = vpack.c.b16 %v972, %v965
    %v1113 = vpack.c.b16 %v980, %v973
    %v1114 = vpack.c.b16 %v981, %v974
    %v1115 = vpack.c.b16 %v982, %v975
    %v1116 = vpack.c.b16 %v983, %v976
    %v1117 = vpack.c.b16 %v984, %v977
    %v1118 = vpack.c.b16 %v985, %v978
    %v1119 = vpack.c.b16 %v986, %v979
    %v1120 = vpack.c.b16 %v994, %v987
    %v1121 = vpack.c.b16 %v995, %v988
    %v1122 = vpack.c.b16 %v996, %v989
    %v1123 = vpack.c.b16 %v997, %v990
    %v1124 = vpack.c.b16 %v998, %v991
    %v1125 = vpack.c.b16 %v999, %v992
    %v1126 = vpack.c.b16 %v1000, %v993
    %v1127 = vpack.c.b16 %v1008, %v1001
    %v1128 = vpack.c.b16 %v1009, %v1002
    %v1129 = vpack.c.b16 %v1010, %v1003
    %v1130 = vpack.c.b16 %v1011, %v1004
    %v1131 = vpack.c.b16 %v1012, %v1005
    %v1132 = vpack.c.b16 %v1013, %v1006
    %v1133 = vpack.c.b16 %v1014, %v1007
    %v1134 = vpack.c.b16 %v1022, %v1015
    %v1135 = vpack.c.b16 %v1023, %v1016
    %v1136 = vpack.c.b16 %v1024, %v1017
    %v1137 = vpack.c.b16 %v1025, %v1018
    %v1138 = vpack.c.b16 %v1026, %v1019
    %v1139 = vpack.c.b16 %v1027, %v1020
    %v1140 = vpack.c.b16 %v1028, %v1021
    %1253 = vmatprep.subr.bf16.mxu0 %v1079
    %1254 = vmatpush1.bf16.msra.mxu0 %v1078
    %1255 = vmatprep.subr.bf16.mxu0 %v1072
    %1256 = vmatpush1.bf16.msra.mxu0 %v1071
    %1257 = vmatprep.subr.bf16.mxu0 %v1065
    %1258 = vmatpush1.bf16.msra.mxu0 %v1064
    %1259 = vmatprep.subr.bf16.mxu0 %v1058
    %1260 = vmatpush1.bf16.msra.mxu0 %v1057
    %1261 = vmatprep.subr.bf16.mxu0 %v1051
    %1262 = vmatpush1.bf16.msra.mxu0 %v1050
    %1263 = vmatprep.subr.bf16.mxu0 %v1044
    %1264 = vmatpush1.bf16.msra.mxu0 %v1043
    %1265 = vmatprep.subr.bf16.mxu0 %v1037
    %1266 = vmatpush1.bf16.msra.mxu0 %v1036
    %1267 = vmatprep.subr.bf16.mxu0 %v1030
    %1268 = vmatpush1.bf16.msra.mxu0 %v1029
    %1269 = vmatprep.subr.bf16.mxu0 %v1135
    %1270 = vmatpush2.bf16.msra.mxu0 %v1134
    %1271 = vmatprep.subr.bf16.mxu0 %v1128
    %1272 = vmatpush2.bf16.msra.mxu0 %v1127
    %1273 = vmatprep.subr.bf16.mxu0 %v1121
    %1274 = vmatpush2.bf16.msra.mxu0 %v1120
    %1275 = vmatprep.subr.bf16.mxu0 %v1114
    %1276 = vmatpush2.bf16.msra.mxu0 %v1113
    %1277 = vmatprep.subr.bf16.mxu0 %v1107
    %1278 = vmatpush2.bf16.msra.mxu0 %v1106
    %1279 = vmatprep.subr.bf16.mxu0 %v1100
    %1280 = vmatpush2.bf16.msra.mxu0 %v1099
    %1281 = vmatprep.subr.bf16.mxu0 %v1093
    %1282 = vmatpush2.bf16.msra.mxu0 %v1092
    %1283 = vmatprep.subr.bf16.mxu0 %v1086
    %1284 = vmatpush2.bf16.msra.mxu0 %v1085
    %1285 = vmatprep.mubr.bf16.mxu0 %v511
    %1286 = vmatmul.mubr.bf16.gmra.mxu0 %v510
    %v1287 = vpop.f32.mrf.mxu0
    %v1288 = vadd.f32 %v645, %v1287
    %v1289 = vpop.f32.mrf.mxu0
    %v1290 = vadd.f32 %v649, %v1289
    %v1291 = vpop.f32.mrf.mxu0
    %v1292 = vadd.f32 %v645, %v1291
    %v1293 = vpop.f32.mrf.mxu0
    %v1294 = vadd.f32 %v649, %v1293
    %1295 = vdwg.mxu0
    %1296 = vmatprep.subr.bf16.mxu0 %v1081
    %1297 = vmatpush1.bf16.msra.mxu0 %v1080
    %1298 = vmatprep.subr.bf16.mxu0 %v1074
    %1299 = vmatpush1.bf16.msra.mxu0 %v1073
    %1300 = vmatprep.subr.bf16.mxu0 %v1067
    %1301 = vmatpush1.bf16.msra.mxu0 %v1066
    %1302 = vmatprep.subr.bf16.mxu0 %v1060
    %1303 = vmatpush1.bf16.msra.mxu0 %v1059
    %1304 = vmatprep.subr.bf16.mxu0 %v1053
    %1305 = vmatpush1.bf16.msra.mxu0 %v1052
    %1306 = vmatprep.subr.bf16.mxu0 %v1046
    %1307 = vmatpush1.bf16.msra.mxu0 %v1045
    %1308 = vmatprep.subr.bf16.mxu0 %v1039
    %1309 = vmatpush1.bf16.msra.mxu0 %v1038
    %1310 = vmatprep.subr.bf16.mxu0 %v1032
    %1311 = vmatpush1.bf16.msra.mxu0 %v1031
    %1312 = vmatprep.subr.bf16.mxu0 %v1137
    %1313 = vmatpush2.bf16.msra.mxu0 %v1136
    %1314 = vmatprep.subr.bf16.mxu0 %v1130
    %1315 = vmatpush2.bf16.msra.mxu0 %v1129
    %1316 = vmatprep.subr.bf16.mxu0 %v1123
    %1317 = vmatpush2.bf16.msra.mxu0 %v1122
    %1318 = vmatprep.subr.bf16.mxu0 %v1116
    %1319 = vmatpush2.bf16.msra.mxu0 %v1115
    %1320 = vmatprep.subr.bf16.mxu0 %v1109
    %1321 = vmatpush2.bf16.msra.mxu0 %v1108
    %1322 = vmatprep.subr.bf16.mxu0 %v1102
    %1323 = vmatpush2.bf16.msra.mxu0 %v1101
    %1324 = vmatprep.subr.bf16.mxu0 %v1095
    %1325 = vmatpush2.bf16.msra.mxu0 %v1094
    %1326 = vmatprep.subr.bf16.mxu0 %v1088
    %1327 = vmatpush2.bf16.msra.mxu0 %v1087
    %1328 = vmatprep.mubr.bf16.mxu0 %v511
    %1329 = vmatmul.mubr.bf16.gmra.mxu0 %v510
    %v1330 = vpop.f32.mrf.mxu0
    %v1331 = vadd.f32 %v653, %v1330
    %v1332 = vpop.f32.mrf.mxu0
    %v1333 = vadd.f32 %v657, %v1332
    %v1334 = vpop.f32.mrf.mxu0
    %v1335 = vadd.f32 %v653, %v1334
    %v1336 = vpop.f32.mrf.mxu0
    %v1337 = vadd.f32 %v657, %v1336
    %1338 = vdwg.mxu0
    %1339 = vmatprep.subr.bf16.mxu0 %v1083
    %1340 = vmatpush1.bf16.msra.mxu0 %v1082
    %1341 = vmatprep.subr.bf16.mxu0 %v1076
    %1342 = vmatpush1.bf16.msra.mxu0 %v1075
    %1343 = vmatprep.subr.bf16.mxu0 %v1069
    %1344 = vmatpush1.bf16.msra.mxu0 %v1068
    %1345 = vmatprep.subr.bf16.mxu0 %v1062
    %1346 = vmatpush1.bf16.msra.mxu0 %v1061
    %1347 = vmatprep.subr.bf16.mxu0 %v1055
    %1348 = vmatpush1.bf16.msra.mxu0 %v1054
    %1349 = vmatprep.subr.bf16.mxu0 %v1048
    %1350 = vmatpush1.bf16.msra.mxu0 %v1047
    %1351 = vmatprep.subr.bf16.mxu0 %v1041
    %1352 = vmatpush1.bf16.msra.mxu0 %v1040
    %1353 = vmatprep.subr.bf16.mxu0 %v1034
    %1354 = vmatpush1.bf16.msra.mxu0 %v1033
    %1355 = vmatprep.subr.bf16.mxu0 %v1139
    %1356 = vmatpush2.bf16.msra.mxu0 %v1138
    %1357 = vmatprep.subr.bf16.mxu0 %v1132
    %1358 = vmatpush2.bf16.msra.mxu0 %v1131
    %1359 = vmatprep.subr.bf16.mxu0 %v1125
    %1360 = vmatpush2.bf16.msra.mxu0 %v1124
    %1361 = vmatprep.subr.bf16.mxu0 %v1118
    %1362 = vmatpush2.bf16.msra.mxu0 %v1117
    %1363 = vmatprep.subr.bf16.mxu0 %v1111
    %1364 = vmatpush2.bf16.msra.mxu0 %v1110
    %1365 = vmatprep.subr.bf16.mxu0 %v1104
    %1366 = vmatpush2.bf16.msra.mxu0 %v1103
    %1367 = vmatprep.subr.bf16.mxu0 %v1097
    %1368 = vmatpush2.bf16.msra.mxu0 %v1096
    %1369 = vmatprep.subr.bf16.mxu0 %v1090
    %1370 = vmatpush2.bf16.msra.mxu0 %v1089
    %1371 = vmatprep.mubr.bf16.mxu0 %v511
    %1372 = vmatmul.mubr.bf16.gmra.mxu0 %v510
    %v1373 = vpop.f32.mrf.mxu0
    %v1374 = vadd.f32 %v661, %v1373
    %v1375 = vpop.f32.mrf.mxu0
    %v1376 = vadd.f32 %v665, %v1375
    %v1377 = vpop.f32.mrf.mxu0
    %v1378 = vadd.f32 %v661, %v1377
    %v1379 = vpop.f32.mrf.mxu0
    %v1380 = vadd.f32 %v665, %v1379
    %1381 = vdwg.mxu0
    %1382 = vmatprep.subr.bf16.mxu0 0
    %1383 = vmatpush1.bf16.msra.mxu0 %v1084
    %1384 = vmatprep.subr.bf16.mxu0 0
    %1385 = vmatpush1.bf16.msra.mxu0 %v1077
    %1386 = vmatprep.subr.bf16.mxu0 0
    %1387 = vmatpush1.bf16.msra.mxu0 %v1070
    %1388 = vmatprep.subr.bf16.mxu0 0
    %1389 = vmatpush1.bf16.msra.mxu0 %v1063
    %1390 = vmatprep.subr.bf16.mxu0 0
    %1391 = vmatpush1.bf16.msra.mxu0 %v1056
    %1392 = vmatprep.subr.bf16.mxu0 0
    %1393 = vmatpush1.bf16.msra.mxu0 %v1049
    %1394 = vmatprep.subr.bf16.mxu0 0
    %1395 = vmatpush1.bf16.msra.mxu0 %v1042
    %1396 = vmatprep.subr.bf16.mxu0 0
    %1397 = vmatpush1.bf16.msra.mxu0 %v1035
    %1398 = vmatprep.subr.bf16.mxu0 0
    %1399 = vmatpush2.bf16.msra.mxu0 %v1140
    %1400 = vmatprep.subr.bf16.mxu0 0
    %1401 = vmatpush2.bf16.msra.mxu0 %v1133
    %1402 = vmatprep.subr.bf16.mxu0 0
    %1403 = vmatpush2.bf16.msra.mxu0 %v1126
    %1404 = vmatprep.subr.bf16.mxu0 0
    %1405 = vmatpush2.bf16.msra.mxu0 %v1119
    %1406 = vmatprep.subr.bf16.mxu0 0
    %1407 = vmatpush2.bf16.msra.mxu0 %v1112
    %1408 = vmatprep.subr.bf16.mxu0 0
    %1409 = vmatpush2.bf16.msra.mxu0 %v1105
    %1410 = vmatprep.subr.bf16.mxu0 0
    %1411 = vmatpush2.bf16.msra.mxu0 %v1098
    %1412 = vmatprep.subr.bf16.mxu0 0
    %1413 = vmatpush2.bf16.msra.mxu0 %v1091
    %1414 = vmatprep.mubr.bf16.mxu0 %v511
    %1415 = vmatmul.mubr.bf16.gmra.mxu0 %v510
    %v1416 = vpop.f32.mrf.mxu0
    %v1417 = vadd.f32 %v669, %v1416
    %v1418 = vpop.f32.mrf.mxu0
    %v1419 = vpop.f32.mrf.mxu0
    %v1420 = vadd.f32 %v669, %v1419
    %v1421 = vpop.f32.mrf.mxu0
    %1422 = vdwg.mxu0
    %v1423 = vtanh.pop %v1288
    %v1424 = vtanh.pop %v1290
    %v1425 = vtanh.pop %v1331
    %v1426 = vtanh.pop %v1333
    %v1427 = vtanh.pop %v1374
    %v1428 = vtanh.pop %v1376
    %v1429 = vtanh.pop %v1417
    %v1430 = vtanh.pop %v1292
    %v1431 = vtanh.pop %v1294
    %v1432 = vtanh.pop %v1335
    %v1433 = vtanh.pop %v1337
    %v1434 = vtanh.pop %v1378
    %v1435 = vtanh.pop %v1380
    %v1436 = vtanh.pop %v1420
    %1437 = vst [vmem:[#allocation11] sm:$0xff] %v1423
    %1438 = vst [vmem:[#allocation11 + $0x8] sm:$0xff] %v1424
    %1439 = vst [vmem:[#allocation11 + $0x10] sm:$0xff] %v1425
    %1440 = vst [vmem:[#allocation11 + $0x18] sm:$0xff] %v1426
    %1441 = vst [vmem:[#allocation11 + $0x20] sm:$0xff] %v1427
    %1442 = vst [vmem:[#allocation11 + $0x28] sm:$0xff] %v1428
    %1443 = vst [vmem:[#allocation11 + $0x30] sm:$0xff] %v1429
    %1444 = vst [vmem:[#allocation11 + $0x38] sm:$0xff] %v1430
    %1445 = vst [vmem:[#allocation11 + $0x40] sm:$0xff] %v1431
    %1446 = vst [vmem:[#allocation11 + $0x48] sm:$0xff] %v1432
    %1447 = vst [vmem:[#allocation11 + $0x50] sm:$0xff] %v1433
    %1448 = vst [vmem:[#allocation11 + $0x58] sm:$0xff] %v1434
    %1449 = vst [vmem:[#allocation11 + $0x60] sm:$0xff] %v1435
    %1450 = vst [vmem:[#allocation11 + $0x68] sm:$0xff] %v1436
    // Predicated region
    $region50: #{tpu_custom_call.1} parent=1 // pred_check
      _
    $region51: #{tpu_custom_call.1} parent=1 // pred_check_branch
      %1452 = sbr.rel (0) target = $region53
    $region52: #{tpu_custom_call.1} parent=1 // pred_region
      %s1454 = ssub.s32 1792, 1792
      %1455 = vsyncadd [#allocation4], %s1454
      %s1456 = sshll.u32 [#allocation11], 4
      %s1457 = int_to_ptr.vmem [resolvable:$true] %s1456
      %1462 = dma.vmem_to_hbm [thread:$0]  %s1457, 1792, %s7, [#allocation4], 896, 896, 56
    $region53: #{tpu_custom_call.1} parent=1 // pred_fallthru
      _
    // Predicated region
    $region54: #{tpu_custom_call.1} parent=1 // pred_check
      _
    $region55: #{tpu_custom_call.1} parent=1 // pred_check_branch
      %1464 = sbr.rel (0) target = $region57
    $region56: #{tpu_custom_call.1} parent=1 // pred_region
      %1465 = dma.done [#allocation4], 1792
    $region57: #{tpu_custom_call.1} parent=1 // pred_fallthru
      _
    %1466 = vsyncpa [#allocation3], 1
    %1467 = vsyncpa [#allocation6], 1
    %1468 = vsyncpa [#allocation9], 1
    %1469 = vsyncpa [#allocation4], 1

</llo_original>
